<compile_context>
chip_gen: v6e
topology: v6e:2x2x1
jax: 0.10.0
libtpu: 0.0.40
codegen_flags: <defaults>
</compile_context>

<pallas_src>
import functools

import jax
import jax.numpy as jnp
from jax.experimental import pallas as pl
from jax.experimental.pallas import tpu as pltpu

USE_SIGMOID = False  # mirrors the `__use_sigmoid__` template flag in the PyTorch source


def _round_up(n: int, m: int) -> int:
    return ((n + m - 1) // m) * m


def _round_down(n: int, m: int) -> int:
    return max(m, (n // m) * m)


def _vmem_capacity_bytes() -> int:
    # Generation-aware VMEM capacity (v5e/v6e: 128 MiB, v7x: 64 MiB per TC).
    try:
        return int(pltpu.get_tpu_info().vmem_capacity_bytes)
    except Exception:
        return 64 * 1024 * 1024  # conservative fallback (v7x-safe)


def _linear_act_kernel(x_ref, w_ref, b_ref, o_ref, *, use_sigmoid: bool):
    # Feature-major layout (batch on the lane axis):
    #   x_ref: (IN, TB)   w_ref: (OUT, IN)   b_ref: (OUT, 1)   o_ref: (OUT, TB)
    x = x_ref[...]
    w = w_ref[...]
    in_dim = x_ref.shape[0]

    # Bias-initialized accumulator; IN(=3) fully-unrolled broadcast-MACs on the VPU.
    acc = jnp.broadcast_to(b_ref[...], o_ref.shape).astype(jnp.float32)
    for k in range(in_dim):
        acc = acc + w[:, k:k + 1] * x[k:k + 1, :]

    if use_sigmoid:
        # Exact sigmoid: exp + reciprocal live on the EUP slot; kernel is
        # mem-bound so exact (approx=False) is free.
        z = pl.reciprocal(1.0 + jnp.exp(-acc), approx=False)
    else:
        z = jnp.maximum(acc, 0.0)
    o_ref[...] = z.astype(o_ref.dtype)


def linear_act(x, w, b, *, use_sigmoid: bool = USE_SIGMOID,
               feature_major_in: bool = False, feature_major_out: bool = False):
    """y = act(x @ w.T + b).

    x: (B, IN) f32 (or (IN, B) if feature_major_in), w: (OUT, IN) f32
    (PyTorch nn.Linear convention), b: (OUT,) f32.
    Returns (B, OUT) f32, or (OUT, B) if feature_major_out.
    """
    if feature_major_in:
        IN, B = x.shape
        x_t = x
    else:
        B, IN = x.shape
        x_t = jnp.transpose(x)  # (IN, B) — single copy, no padding
    OUT, IN_w = w.shape
    assert IN == IN_w and b.shape == (OUT,)

    # --- Tile sizing: biggest lane-dense batch tile that fits the VMEM budget. ---
    cap = _vmem_capacity_bytes()
    vmem_limit = min(int(cap * 3 // 4), cap - 8 * 1024 * 1024)   # ~96 MiB / ~40 MiB
    tile_budget = int(cap * 9 // 16)                              # ~72 MiB / ~36 MiB
    bytes_per_lane = 2 * (IN + OUT) * x.dtype.itemsize            # double-buffered x + out cols
    tb_budget = _round_down(tile_budget // bytes_per_lane, 128)

    TB = min(tb_budget, _round_up(max(B, 1), 128))
    # Keep >=2 grid steps when the batch is big enough, so ("parallel",) actually
    # spreads tiles across both TensorCores on v7x.
    if B > 2 * 128 and pl.cdiv(B, TB) < 2:
        TB = max(128, _round_up(pl.cdiv(B, 2), 128))
    grid = (pl.cdiv(B, TB),)  # ragged last block handled by Pallas (masked stores)

    b2 = b.reshape(OUT, 1)
    kernel = functools.partial(_linear_act_kernel, use_sigmoid=use_sigmoid)

    cost = pl.CostEstimate(
        flops=2 * IN * OUT * B,
        transcendentals=(OUT * B) if use_sigmoid else 0,
        bytes_accessed=(IN + OUT) * x.dtype.itemsize * B + (OUT * IN + OUT) * 4,
    )

    out_t = pl.pallas_call(
        kernel,
        out_shape=jax.ShapeDtypeStruct((OUT, B), x.dtype),
        grid_spec=pl.GridSpec(
            grid=grid,
            in_specs=[
                pl.BlockSpec((IN, TB), lambda j: (0, j)),    # streamed x tile
                pl.BlockSpec((OUT, IN), lambda j: (0, 0)),   # weight: VMEM-resident
                pl.BlockSpec((OUT, 1), lambda j: (0, 0)),    # bias:   VMEM-resident
            ],
            out_specs=pl.BlockSpec((OUT, TB), lambda j: (0, j)),
        ),
        compiler_params=pltpu.CompilerParams(
            dimension_semantics=("parallel",),   # batch tiles shard across TCs (v7x)
            vmem_limit_bytes=vmem_limit,
        ),
        cost_estimate=cost,
    )(x_t, w, b2)

    if feature_major_out:
        return out_t            # (OUT, B): lets a feature-major consumer skip the transpose
    return jnp.transpose(out_t)  # (B, OUT): matches the PyTorch module's output layout


def reference(x, w, b, *, use_sigmoid: bool):
    y = x @ w.T + b
    return jax.nn.sigmoid(y) if use_sigmoid else jnp.maximum(y, 0.0)


if __name__ == "__main__":
    key = jax.random.PRNGKey(0)
    kx, kw, kb = jax.random.split(key, 3)

    B, IN, OUT = 2, 3, 8  # module: Linear(3, 8); small batch like the spec's (1, 3) input
    x = jax.random.normal(kx, (B, IN), dtype=jnp.float32)
    # torch stores nn.Linear weight as (OUT, IN); we use the same convention.
    w = jax.random.normal(kw, (OUT, IN), dtype=jnp.float32) * (1.0 / jnp.sqrt(IN))
    b = jax.random.normal(kb, (OUT,), dtype=jnp.float32) * 0.1

    # Default path: __use_sigmoid__ == False -> ReLU.
    out = jax.block_until_ready(linear_act(x, w, b, use_sigmoid=False))
    ref = reference(x, w, b, use_sigmoid=False)
    assert out.shape == (B, OUT)
    assert jnp.allclose(out, ref, atol=1e-5, rtol=1e-5), (out, ref)

    # Sigmoid path (exact EUP sigmoid).
    out_s = jax.block_until_ready(linear_act(x, w, b, use_sigmoid=True))
    ref_s = reference(x, w, b, use_sigmoid=True)
    assert out_s.shape == (B, OUT)
    assert jnp.allclose(out_s, ref_s, atol=1e-5, rtol=1e-5), (out_s, ref_s)

    # Ragged multi-tile grid sanity check (exercises the cdiv grid + masked stores).
    B2 = 300
    x2 = jax.random.normal(kx, (B2, IN), dtype=jnp.float32)
    out2 = jax.block_until_ready(linear_act(x2, w, b, use_sigmoid=False))
    ref2 = reference(x2, w, b, use_sigmoid=False)
    assert out2.shape == (B2, OUT)
    assert jnp.allclose(out2, ref2, atol=1e-5, rtol=1e-5)

    # Feature-major output variant (no wrapper transpose).
    out_fm = jax.block_until_ready(
        linear_act(x2, w, b, use_sigmoid=False, feature_major_out=True))
    assert out_fm.shape == (OUT, B2)
    assert jnp.allclose(jnp.transpose(out_fm), ref2, atol=1e-5, rtol=1e-5)

    print("KERNEL_OK")
</pallas_src>

<mosaic_0001>
module attributes {stable_mosaic.version = 11 : i64} {
  func.func @_linear_act_kernel(%arg0: i32, %arg1: memref<3x128xf32, #tpu.memory_space<vmem>>, %arg2: memref<8x3xf32, #tpu.memory_space<vmem>>, %arg3: memref<8x1xf32, #tpu.memory_space<vmem>>, %arg4: memref<8x128xf32, #tpu.memory_space<vmem>>) attributes {dimension_semantics = [#tpu.dimension_semantics<parallel>], iteration_bounds = array<i64: 1>, scalar_prefetch = 0 : i64, scratch_operands = 0 : i64, tpu.core_type = #tpu.core_type<tc>, window_params = [{transform_indices = @transform_0, window_bounds = array<i64: 3, 128>}, {pipeline_mode = #tpu.pipeline_mode<synchronous>, transform_indices = @transform_1, window_bounds = array<i64: 8, 3>}, {pipeline_mode = #tpu.pipeline_mode<synchronous>, transform_indices = @transform_2, window_bounds = array<i64: 8, 1>}, {transform_indices = @transform_3, window_bounds = array<i64: 8, 128>}]} {
    %c0 = arith.constant 0 : index
    %c0_0 = arith.constant 0 : index
    %0 = vector.load %arg1[%c0, %c0_0] : memref<3x128xf32, #tpu.memory_space<vmem>>, vector<3x128xf32>
    %c0_1 = arith.constant 0 : index
    %c0_2 = arith.constant 0 : index
    %1 = vector.load %arg2[%c0_1, %c0_2] : memref<8x3xf32, #tpu.memory_space<vmem>>, vector<8x3xf32>
    %c0_3 = arith.constant 0 : index
    %c0_4 = arith.constant 0 : index
    %2 = vector.load %arg3[%c0_3, %c0_4] : memref<8x1xf32, #tpu.memory_space<vmem>>, vector<8x1xf32>
    %3 = vector.shape_cast %2 : vector<8x1xf32> to vector<8x1xf32>
    %4 = vector.broadcast %3 : vector<8x1xf32> to vector<8x128xf32>
    %5 = vector.extract_strided_slice %1 {offsets = [0, 0], sizes = [8, 1], strides = [1, 1]} : vector<8x3xf32> to vector<8x1xf32>
    %6 = vector.extract_strided_slice %0 {offsets = [0, 0], sizes = [1, 128], strides = [1, 1]} : vector<3x128xf32> to vector<1x128xf32>
    %7 = vector.broadcast %5 : vector<8x1xf32> to vector<8x128xf32>
    %8 = vector.broadcast %6 : vector<1x128xf32> to vector<8x128xf32>
    %9 = arith.mulf %7, %8 : vector<8x128xf32>
    %10 = arith.addf %4, %9 : vector<8x128xf32>
    %11 = vector.extract_strided_slice %1 {offsets = [0, 1], sizes = [8, 1], strides = [1, 1]} : vector<8x3xf32> to vector<8x1xf32>
    %12 = vector.extract_strided_slice %0 {offsets = [1, 0], sizes = [1, 128], strides = [1, 1]} : vector<3x128xf32> to vector<1x128xf32>
    %13 = vector.broadcast %11 : vector<8x1xf32> to vector<8x128xf32>
    %14 = vector.broadcast %12 : vector<1x128xf32> to vector<8x128xf32>
    %15 = arith.mulf %13, %14 : vector<8x128xf32>
    %16 = arith.addf %10, %15 : vector<8x128xf32>
    %17 = vector.extract_strided_slice %1 {offsets = [0, 2], sizes = [8, 1], strides = [1, 1]} : vector<8x3xf32> to vector<8x1xf32>
    %18 = vector.extract_strided_slice %0 {offsets = [2, 0], sizes = [1, 128], strides = [1, 1]} : vector<3x128xf32> to vector<1x128xf32>
    %19 = vector.broadcast %17 : vector<8x1xf32> to vector<8x128xf32>
    %20 = vector.broadcast %18 : vector<1x128xf32> to vector<8x128xf32>
    %21 = arith.mulf %19, %20 : vector<8x128xf32>
    %22 = arith.addf %16, %21 : vector<8x128xf32>
    %cst = arith.constant 0.000000e+00 : f32
    %23 = vector.broadcast %cst : f32 to vector<8x128xf32>
    %24 = arith.maximumf %22, %23 : vector<8x128xf32>
    %c0_5 = arith.constant 0 : index
    %c0_6 = arith.constant 0 : index
    %25 = vector.load %arg4[%c0_5, %c0_6] : memref<8x128xf32, #tpu.memory_space<vmem>>, vector<8x128xf32>
    tpu.vector_store %arg4[%c0_5, %c0_6], %24 {strides = array<i32>} : memref<8x128xf32, #tpu.memory_space<vmem>>, vector<8x128xf32>,
    return
  }
  func.func @transform_0(%arg0: i32) -> (i32, i32) {
    %c0_i32 = arith.constant 0 : i32
    %c0_i32_0 = arith.constant 0 : i32
    return %c0_i32, %arg0 : i32, i32
  }
  func.func @transform_1(%arg0: i32) -> (i32, i32) {
    %c0_i32 = arith.constant 0 : i32
    %c0_i32_0 = arith.constant 0 : i32
    %c0_i32_1 = arith.constant 0 : i32
    return %c0_i32, %c0_i32_0 : i32, i32
  }
  func.func @transform_2(%arg0: i32) -> (i32, i32) {
    %c0_i32 = arith.constant 0 : i32
    %c0_i32_0 = arith.constant 0 : i32
    %c0_i32_1 = arith.constant 0 : i32
    return %c0_i32, %c0_i32_0 : i32, i32
  }
  func.func @transform_3(%arg0: i32) -> (i32, i32) {
    %c0_i32 = arith.constant 0 : i32
    %c0_i32_0 = arith.constant 0 : i32
    return %c0_i32, %arg0 : i32, i32
  }
}

</mosaic_0001>

<llo_original>
// kernel: tpu_custom_call.1
$region0: #{tpu_custom_call.1}
  #allocation0 [shape = 'u32[]', space=smem, size = 0x4, offset = 0x4, fixed_abs, tag = 'smem constant byte address 0x4 - core index']
  #allocation1 [shape = 'u32[144,128]{1,0:T(1,128)}', space=vmem, size = 0x12000, scoped, tag = 'internal scratch']
  %s0 = inlined_call_operand.vmem [shape: f32[3,2], index: 0, kind: input, shape index: {}]
  %s1 = inlined_call_operand.vmem [shape: f32[8,3], index: 1, kind: input, shape index: {}]
  %s2 = inlined_call_operand.vmem [shape: f32[8,1], index: 2, kind: input, shape index: {}]
  %s3 = inlined_call_operand.vmem [shape: f32[8,2], index: 3, kind: output, shape index: {}]
  %s4 = sld [smem:[#allocation0]]
  $region22: #{tpu_custom_call.1} parent=0
    _
  %s6 = ssub.s32 1, %s4
  %s7 = scalar_select 0, %s6, %s4
  // Predicated region
  $region2: #{tpu_custom_call.1} parent=0 // pred_check
    _
  $region3: #{tpu_custom_call.1} parent=0 // pred_check_branch
    %9 = sbr.rel (0) target = $region5
  $region4: #{tpu_custom_call.1} parent=0 // pred_region
    _
  $region5: #{tpu_custom_call.1} parent=0 // pred_fallthru
    _
  // Predicated region
  $region6: #{tpu_custom_call.1} parent=0 // pred_check
    _
  $region7: #{tpu_custom_call.1} parent=0 // pred_check_branch
    %11 = sbr.rel (0) target = $region9
  $region8: #{tpu_custom_call.1} parent=0 // pred_region
    _
  $region9: #{tpu_custom_call.1} parent=0 // pred_fallthru
    _
  // Predicated region
  $region10: #{tpu_custom_call.1} parent=0 // pred_check
    _
  $region11: #{tpu_custom_call.1} parent=0 // pred_check_branch
    %13 = sbr.rel (0) target = $region13
  $region12: #{tpu_custom_call.1} parent=0 // pred_region
    _
  $region13: #{tpu_custom_call.1} parent=0 // pred_fallthru
    _
  %v14 = vld [vmem:[%s0] sm:$0x7]
  %v15 = vld [vmem:[%s1] sm:$0xff]
  %v16 = vld [vmem:[%s2] sm:$0xff]
  %18 = vset.pattern.permute.xlu0 0
  %19 = vperm.xlu0 %18, %v16
  %v20 = vpop.permute.xlu0 %19
  %23 = vset.pattern.permute.xlu0 0
  %24 = vperm.xlu0 %23, %v15
  %v25 = vpop.permute.xlu0 %24
  %v27 = vlaneseq
  %v28 = vshrl.u32 %v27, 7
  %v29 = vsub.s32 0, %v28
  %v30 = vrot.slane %v14, %v29
  %v31 = vmul.f32 %v25, %v30
  %v32 = vadd.f32 %v20, %v31
  %33 = vset.pattern.permute.xlu0 1
  %34 = vperm.xlu0 %33, %v15
  %v35 = vpop.permute.xlu0 %34
  %v37 = vlaneseq
  %v38 = vshrl.u32 %v37, 7
  %v39 = vsub.s32 1, %v38
  %v40 = vrot.slane %v14, %v39
  %v41 = vmul.f32 %v35, %v40
  %v42 = vadd.f32 %v32, %v41
  %43 = vset.pattern.permute.xlu0 2
  %44 = vperm.xlu0 %43, %v15
  %v45 = vpop.permute.xlu0 %44
  %v47 = vlaneseq
  %v48 = vshrl.u32 %v47, 7
  %v49 = vsub.s32 2, %v48
  %v50 = vrot.slane %v14, %v49
  %v51 = vmul.f32 %v45, %v50
  %v52 = vadd.f32 %v42, %v51
  %v53 = vmax.f32 %v52, 0.0
  %54 = vst [vmem:[%s3] sm:$0xff] %v53
  // Predicated region
  $region14: #{tpu_custom_call.1} parent=0 // pred_check
    _
  $region15: #{tpu_custom_call.1} parent=0 // pred_check_branch
    %56 = sbr.rel (0) target = $region17
  $region16: #{tpu_custom_call.1} parent=0 // pred_region
    _
  $region17: #{tpu_custom_call.1} parent=0 // pred_fallthru
    _
  // Predicated region
  $region18: #{tpu_custom_call.1} parent=0 // pred_check
    _
  $region19: #{tpu_custom_call.1} parent=0 // pred_check_branch
    %58 = sbr.rel (0) target = $region21
  $region20: #{tpu_custom_call.1} parent=0 // pred_region
    _
  $region21: #{tpu_custom_call.1} parent=0 // pred_fallthru
    _

</llo_original>
